<compile_context>
chip_gen: v6e
topology: v6e:2x2x1
jax: 0.10.0
libtpu: 0.0.40
codegen_flags: <defaults>
</compile_context>

<pallas_src>
import functools

import jax
import jax.numpy as jnp
from jax.experimental import pallas as pl
from jax.experimental.pallas import tpu as pltpu


def _round_up(v, m):
    return (v + m - 1) // m * m


# ---------------------------------------------------------------------------
# Fused kernel: y = relu(x @ W1 + b1) @ W2 + b2 for one row tile.
# ---------------------------------------------------------------------------
def shared_mlp_kernel(x_ref, w1_ref, b1_ref, w2_ref, b2_ref, o_ref, *,
                      compute_dtype):
    # x_ref:  (TM, K)   input row tile (caller dtype)
    # w1_ref: (K, H)    first Linear weight, pre-transposed, compute_dtype
    # b1_ref: (1, H)    first Linear bias, f32
    # w2_ref: (H, N)    second Linear weight, pre-transposed, compute_dtype
    # b2_ref: (1, N)    second Linear bias, f32
    # o_ref:  (TM, N)   output row tile (caller dtype)
    x = x_ref[...].astype(compute_dtype)                       # MXU operand
    h = jnp.dot(x, w1_ref[...], preferred_element_type=jnp.float32)
    h = jnp.maximum(h + b1_ref[...], 0.0)                      # f32 epilogue
    y = jnp.dot(h.astype(compute_dtype), w2_ref[...],
                preferred_element_type=jnp.float32)
    o_ref[...] = (y + b2_ref[...]).astype(o_ref.dtype)


# ---------------------------------------------------------------------------
# Wrapper: flatten leading dims, choose row tile, run the fused kernel.
# ---------------------------------------------------------------------------
def shared_mlp(x, params, *, tm=512, compute_dtype=jnp.bfloat16):
    """Fused two-layer MLP matching PyTorch SharedMLP.forward.

    x: (..., input_dim). params follow the nn.Linear convention:
      w1: (hidden_dim, input_dim), b1: (hidden_dim,),
      w2: (output_dim, hidden_dim), b2: (output_dim,).
    """
    w1, b1, w2, b2 = params
    hidden_dim, input_dim = w1.shape
    output_dim = w2.shape[0]

    lead_shape = x.shape[:-1]
    xf = x.reshape(-1, input_dim)
    m = xf.shape[0]
    out_dtype = x.dtype

    # Row tile: multiple of 8 (sublane). For small m, split into >= 2 blocks so
    # both v7x TensorCores get work under the "parallel" grid axis.
    if m <= tm:
        tm = _round_up(max(pl.cdiv(m, 2), 8), 8)

    # VMEM accounting (double-buffered per-step blocks + resident weights +
    # the f32 hidden activation); shrink tm if the estimate exceeds ~48 MiB.
    def vmem_estimate(t):
        x_blk = t * input_dim * xf.dtype.itemsize
        o_blk = t * output_dim * jnp.dtype(out_dtype).itemsize
        w_res = (input_dim * hidden_dim + hidden_dim * output_dim) \
            * jnp.dtype(compute_dtype).itemsize
        b_res = (hidden_dim + output_dim) * 4
        hid = t * hidden_dim * 4
        return 2 * (x_blk + o_blk + w_res + b_res) + hid

    while vmem_estimate(tm) > (48 << 20) and tm > 64:
        tm = max(64, _round_up(tm // 2, 8))
    vmem_limit = int(min(max(2 * vmem_estimate(tm), 32 << 20), 64 << 20))

    grid = (pl.cdiv(m, tm),)

    w1t = jnp.asarray(w1, compute_dtype).T                     # (K, H)
    w2t = jnp.asarray(w2, compute_dtype).T                     # (H, N)
    b1r = jnp.asarray(b1, jnp.float32).reshape(1, hidden_dim)
    b2r = jnp.asarray(b2, jnp.float32).reshape(1, output_dim)

    flops = 2 * m * (input_dim * hidden_dim + hidden_dim * output_dim)
    bytes_accessed = (
        m * input_dim * xf.dtype.itemsize                       # x read
        + (input_dim * hidden_dim + hidden_dim * output_dim)
        * jnp.dtype(compute_dtype).itemsize                     # W1, W2
        + (hidden_dim + output_dim) * 4                         # b1, b2
        + m * output_dim * jnp.dtype(out_dtype).itemsize)       # y write

    kernel = functools.partial(shared_mlp_kernel, compute_dtype=compute_dtype)

    out = pl.pallas_call(
        kernel,
        grid=grid,
        in_specs=[
            pl.BlockSpec((tm, input_dim), lambda i: (i, 0)),
            pl.BlockSpec((input_dim, hidden_dim), lambda i: (0, 0)),
            pl.BlockSpec((1, hidden_dim), lambda i: (0, 0)),
            pl.BlockSpec((hidden_dim, output_dim), lambda i: (0, 0)),
            pl.BlockSpec((1, output_dim), lambda i: (0, 0)),
        ],
        out_specs=pl.BlockSpec((tm, output_dim), lambda i: (i, 0)),
        out_shape=jax.ShapeDtypeStruct((m, output_dim), out_dtype),
        compiler_params=pltpu.CompilerParams(
            dimension_semantics=("parallel",),
            vmem_limit_bytes=vmem_limit),
        cost_estimate=pl.CostEstimate(
            flops=flops, transcendentals=0, bytes_accessed=int(bytes_accessed)),
    )(xf, w1t, b1r, w2t, b2r)

    return out.reshape(*lead_shape, output_dim)


# ---------------------------------------------------------------------------
# References for numerical verification.
# ---------------------------------------------------------------------------
def reference_mixed(x, params, compute_dtype=jnp.bfloat16):
    """Same bf16-operand / f32-accumulate recipe as the kernel."""
    w1, b1, w2, b2 = params
    h = jnp.dot(x.astype(compute_dtype), w1.astype(compute_dtype).T,
                preferred_element_type=jnp.float32) + b1
    h = jnp.maximum(h, 0.0)
    return jnp.dot(h.astype(compute_dtype), w2.astype(compute_dtype).T,
                   preferred_element_type=jnp.float32) + b2


def reference_fp32(x, params):
    w1, b1, w2, b2 = params
    h = jnp.maximum(x @ w1.T + b1, 0.0)
    return h @ w2.T + b2


if __name__ == "__main__":
    key = jax.random.PRNGKey(0)
    ks = jax.random.split(key, 5)

    # Small shapes consistent with the module: a (batch, seq) grid of feature
    # vectors fed through the shared MLP.
    batch, seq = 2, 8
    input_dim, hidden_dim, output_dim = 64, 128, 32

    def linear_init(kw, kb, out_d, in_d):
        # PyTorch nn.Linear default init: U(-1/sqrt(in), 1/sqrt(in)).
        bound = 1.0 / (in_d ** 0.5)
        w = jax.random.uniform(kw, (out_d, in_d), jnp.float32, -bound, bound)
        b = jax.random.uniform(kb, (out_d,), jnp.float32, -bound, bound)
        return w, b

    w1, b1 = linear_init(ks[0], ks[1], hidden_dim, input_dim)
    w2, b2 = linear_init(ks[2], ks[3], output_dim, hidden_dim)
    params = (w1, b1, w2, b2)

    x = jax.random.normal(ks[4], (batch, seq, input_dim), jnp.float32)

    fwd = jax.jit(functools.partial(shared_mlp, tm=512))
    out = jax.block_until_ready(fwd(x, params))
    assert out.shape == (batch, seq, output_dim), out.shape
    out_f32 = jnp.asarray(out, jnp.float32)

    # Check kernel mechanics against the identically-quantized reference.
    ref_m = jax.block_until_ready(jax.jit(reference_mixed)(x, params))
    err_m = float(jnp.max(jnp.abs(out_f32 - ref_m)))
    if err_m > 5e-3:
        raise AssertionError(f"mismatch vs mixed-precision reference: {err_m}")

    # Sanity check against the full-f32 PyTorch-equivalent forward.
    ref_f = jax.block_until_ready(jax.jit(reference_fp32)(x, params))
    err_f = float(jnp.max(jnp.abs(out_f32 - ref_f)))
    if err_f > 5e-2:
        raise AssertionError(f"mismatch vs f32 reference: {err_f}")

    print("KERNEL_OK")
</pallas_src>

<mosaic_0001>
module attributes {stable_mosaic.version = 11 : i64} {
  func.func @shared_mlp_kernel(%arg0: i32, %arg1: memref<8x64xf32, #tpu.memory_space<vmem>>, %arg2: memref<64x128xbf16, #tpu.memory_space<vmem>>, %arg3: memref<1x128xf32, #tpu.memory_space<vmem>>, %arg4: memref<128x32xbf16, #tpu.memory_space<vmem>>, %arg5: memref<1x32xf32, #tpu.memory_space<vmem>>, %arg6: memref<8x32xf32, #tpu.memory_space<vmem>>) attributes {dimension_semantics = [#tpu.dimension_semantics<parallel>], iteration_bounds = array<i64: 2>, scalar_prefetch = 0 : i64, scratch_operands = 0 : i64, tpu.core_type = #tpu.core_type<tc>, window_params = [{transform_indices = @transform_0, window_bounds = array<i64: 8, 64>}, {pipeline_mode = #tpu.pipeline_mode<synchronous>, transform_indices = @transform_1, window_bounds = array<i64: 64, 128>}, {pipeline_mode = #tpu.pipeline_mode<synchronous>, transform_indices = @transform_2, window_bounds = array<i64: 1, 128>}, {pipeline_mode = #tpu.pipeline_mode<synchronous>, transform_indices = @transform_3, window_bounds = array<i64: 128, 32>}, {pipeline_mode = #tpu.pipeline_mode<synchronous>, transform_indices = @transform_4, window_bounds = array<i64: 1, 32>}, {transform_indices = @transform_5, window_bounds = array<i64: 8, 32>}]} {
    %c0 = arith.constant 0 : index
    %c0_0 = arith.constant 0 : index
    %0 = vector.load %arg1[%c0, %c0_0] : memref<8x64xf32, #tpu.memory_space<vmem>>, vector<8x64xf32>
    %1 = arith.truncf %0 : vector<8x64xf32> to vector<8x64xbf16>
    %c0_1 = arith.constant 0 : index
    %c0_2 = arith.constant 0 : index
    %2 = vector.load %arg2[%c0_1, %c0_2] : memref<64x128xbf16, #tpu.memory_space<vmem>>, vector<64x128xbf16>
    %cst = arith.constant dense<0.000000e+00> : vector<8x128xf32>
    %3 = tpu.matmul %1, %2, %cst {dimension_numbers = #tpu.dot_dimension_numbers<[1], [0], [0], [1], [0, 0, 1, 1], [], []>} : vector<8x64xbf16>, vector<64x128xbf16>, vector<8x128xf32> -> vector<8x128xf32>
    %c0_3 = arith.constant 0 : index
    %c0_4 = arith.constant 0 : index
    %4 = vector.load %arg3[%c0_3, %c0_4] : memref<1x128xf32, #tpu.memory_space<vmem>>, vector<1x128xf32>
    %5 = vector.broadcast %4 : vector<1x128xf32> to vector<8x128xf32>
    %6 = arith.addf %3, %5 : vector<8x128xf32>
    %cst_5 = arith.constant 0.000000e+00 : f32
    %7 = vector.broadcast %cst_5 : f32 to vector<8x128xf32>
    %8 = arith.maximumf %6, %7 : vector<8x128xf32>
    %9 = arith.truncf %8 : vector<8x128xf32> to vector<8x128xbf16>
    %c0_6 = arith.constant 0 : index
    %c0_7 = arith.constant 0 : index
    %10 = vector.load %arg4[%c0_6, %c0_7] : memref<128x32xbf16, #tpu.memory_space<vmem>>, vector<128x32xbf16>
    %cst_8 = arith.constant dense<0.000000e+00> : vector<8x32xf32>
    %11 = tpu.matmul %9, %10, %cst_8 {dimension_numbers = #tpu.dot_dimension_numbers<[1], [0], [0], [1], [0, 0, 1, 1], [], []>} : vector<8x128xbf16>, vector<128x32xbf16>, vector<8x32xf32> -> vector<8x32xf32>
    %c0_9 = arith.constant 0 : index
    %c0_10 = arith.constant 0 : index
    %12 = vector.load %arg5[%c0_9, %c0_10] : memref<1x32xf32, #tpu.memory_space<vmem>>, vector<1x32xf32>
    %13 = vector.broadcast %12 : vector<1x32xf32> to vector<8x32xf32>
    %14 = arith.addf %11, %13 : vector<8x32xf32>
    %c0_11 = arith.constant 0 : index
    %c0_12 = arith.constant 0 : index
    %15 = vector.load %arg6[%c0_11, %c0_12] : memref<8x32xf32, #tpu.memory_space<vmem>>, vector<8x32xf32>
    tpu.vector_store %arg6[%c0_11, %c0_12], %14 {strides = array<i32>} : memref<8x32xf32, #tpu.memory_space<vmem>>, vector<8x32xf32>,
    return
  }
  func.func @transform_0(%arg0: i32) -> (i32, i32) {
    %c0_i32 = arith.constant 0 : i32
    %c0_i32_0 = arith.constant 0 : i32
    return %arg0, %c0_i32 : i32, i32
  }
  func.func @transform_1(%arg0: i32) -> (i32, i32) {
    %c0_i32 = arith.constant 0 : i32
    %c0_i32_0 = arith.constant 0 : i32
    %c0_i32_1 = arith.constant 0 : i32
    return %c0_i32, %c0_i32_0 : i32, i32
  }
  func.func @transform_2(%arg0: i32) -> (i32, i32) {
    %c0_i32 = arith.constant 0 : i32
    %c0_i32_0 = arith.constant 0 : i32
    %c0_i32_1 = arith.constant 0 : i32
    return %c0_i32, %c0_i32_0 : i32, i32
  }
  func.func @transform_3(%arg0: i32) -> (i32, i32) {
    %c0_i32 = arith.constant 0 : i32
    %c0_i32_0 = arith.constant 0 : i32
    %c0_i32_1 = arith.constant 0 : i32
    return %c0_i32, %c0_i32_0 : i32, i32
  }
  func.func @transform_4(%arg0: i32) -> (i32, i32) {
    %c0_i32 = arith.constant 0 : i32
    %c0_i32_0 = arith.constant 0 : i32
    %c0_i32_1 = arith.constant 0 : i32
    return %c0_i32, %c0_i32_0 : i32, i32
  }
  func.func @transform_5(%arg0: i32) -> (i32, i32) {
    %c0_i32 = arith.constant 0 : i32
    %c0_i32_0 = arith.constant 0 : i32
    return %arg0, %c0_i32 : i32, i32
  }
}

</mosaic_0001>

<llo_original>
// kernel: shared_mlp.1
$region0: #{shared_mlp.1}
  #allocation0 [shape = 'u32[]', space=smem, size = 0x4, offset = 0x4, fixed_abs, tag = 'smem constant byte address 0x4 - core index']
  #allocation1 [shape = 'u32[144,128]{1,0:T(1,128)}', space=vmem, size = 0x12000, scoped, tag = 'internal scratch']
  %s0 = inlined_call_operand.vmem [shape: f32[16,64], index: 0, kind: input, shape index: {}]
  %s1 = inlined_call_operand.vmem [shape: bf16[64,128], index: 1, kind: input, shape index: {}]
  %s2 = inlined_call_operand.vmem [shape: f32[1,128], index: 2, kind: input, shape index: {}]
  %s3 = inlined_call_operand.vmem [shape: bf16[128,32], index: 3, kind: input, shape index: {}]
  %s4 = inlined_call_operand.vmem [shape: f32[1,32], index: 4, kind: input, shape index: {}]
  %s5 = inlined_call_operand.hbm [shape: f32[16,32], index: 5, kind: output, shape index: {}]
  %s6 = sld [smem:[#allocation0]]
  $region53: #{shared_mlp.1} parent=0
    _
  %s8 = ssub.s32 1, %s6
  %s9 = scalar_select 0, %s8, %s6
  $region1: #{shared_mlp.1} parent=0
    #allocation2 [shape = 'u8[8192]{0}', space=vmem, size = 0x2000, scoped, tag = 'output window, operand 0']
    #allocation3 [shape = 's32[2]{0}', space=sflag, size = 0x8, scoped, tag = 'scoped memory for shared_mlp.1']
    %10 = vsyncpa [#allocation3], 0
    %s11 = scalar_lea.sflag [#allocation3], 1
    %12 = vsyncpa %s11, 0
    loop: start=0, step=1, limit=4
    $region2: #{shared_mlp.1} parent=1 // loop_pre_header
      _
    $region3: #{shared_mlp.1} parent=1 // loop_header
      %s14 = sphi 0, %s18
      %p15 = scmp.ge.s32.totalorder %s14, 4
      %s24 = sphi 0, %s26
      %s27 = sphi 0, %s24
      %s28 = sphi 0, %s27
      %s44 = sphi 0, %s28
      %s48 = sphi 0, %s48
      %s50 = sphi 0, %s48
      %s51 = sphi 0, %s50
      %s65 = sphi 0, %s51
      %s69 = sphi 0, %s69
      %s71 = sphi 0, %s69
      %s72 = sphi 0, %s71
      %s86 = sphi 0, %s72
      %s90 = sphi 0, %s90
      %s92 = sphi 0, %s90
      %s93 = sphi 0, %s92
      %s107 = sphi 0, %s93
      %s111 = sphi 0, %s111
      %s113 = sphi 0, %s111
      %s114 = sphi 0, %s113
      %s128 = sphi 0, %s114
      %s134 = sphi 0, %s136
      %s137 = sphi 0, %s134
      %s138 = sphi 0, %s137
      %s154 = sphi 0, %s138
    $region4: #{shared_mlp.1} parent=1 // loop_header_branch
      %17 = sbr.rel (%p15) target = $region8
    $region5: #{shared_mlp.1} parent=1 // loop_body
      %s19 = ssub.s32 %s14, 1
      %s20 = ssub.s32 %s14, 2
      %s21 = sadd.s32 %s14, 1
      %s22 = ssub.s32 %s14, %s21
      %p23 = scmp.eq.s32.totalorder %s22, 0
      %s25 = sadd.s32 %s24, 1
      %s26 = scalar_select %p23, %s24, %s25
      %p29 = pneg %p23
      %p30 = scmp.eq.s32.totalorder %s14, 1
      %p31 = por %p29, %p30
      %p32 = scmp.ne.s32.totalorder %s24, %s27
      %p33 = scmp.eq.s32.totalorder %s14, 0
      %p34 = por %p32, %p33
      %p35 = scmp.ne.s32.totalorder %s24, %s27
      %p36 = scmp.eq.s32.totalorder %s19, 1
      %p37 = por %p35, %p36
      %p38 = scmp.ne.s32.totalorder %s27, %s28
      %p39 = scmp.eq.s32.totalorder %s19, 0
      %p40 = por %p38, %p39
      %p41 = scmp.ne.s32.totalorder %s27, %s28
      %p42 = scmp.eq.s32.totalorder %s20, 1
      %p43 = por %p41, %p42
      %p45 = scmp.ne.s32.totalorder %s28, %s44
      %p46 = scmp.eq.s32.totalorder %s20, 0
      %p47 = por %p45, %p46
      %s49 = sadd.s32 %s48, 1
      %p52 = scmp.eq.s32.totalorder %s14, 1
      %p53 = scmp.ne.s32.totalorder %s48, %s50
      %p54 = scmp.eq.s32.totalorder %s14, 0
      %p55 = por %p53, %p54
      %p56 = scmp.ne.s32.totalorder %s48, %s50
      %p57 = scmp.eq.s32.totalorder %s19, 1
      %p58 = por %p56, %p57
      %p59 = scmp.ne.s32.totalorder %s50, %s51
      %p60 = scmp.eq.s32.totalorder %s19, 0
      %p61 = por %p59, %p60
      %p62 = scmp.ne.s32.totalorder %s50, %s51
      %p63 = scmp.eq.s32.totalorder %s20, 1
      %p64 = por %p62, %p63
      %p66 = scmp.ne.s32.totalorder %s51, %s65
      %p67 = scmp.eq.s32.totalorder %s20, 0
      %p68 = por %p66, %p67
      %s70 = sadd.s32 %s69, 1
      %p73 = scmp.eq.s32.totalorder %s14, 1
      %p74 = scmp.ne.s32.totalorder %s69, %s71
      %p75 = scmp.eq.s32.totalorder %s14, 0
      %p76 = por %p74, %p75
      %p77 = scmp.ne.s32.totalorder %s69, %s71
      %p78 = scmp.eq.s32.totalorder %s19, 1
      %p79 = por %p77, %p78
      %p80 = scmp.ne.s32.totalorder %s71, %s72
      %p81 = scmp.eq.s32.totalorder %s19, 0
      %p82 = por %p80, %p81
      %p83 = scmp.ne.s32.totalorder %s71, %s72
      %p84 = scmp.eq.s32.totalorder %s20, 1
      %p85 = por %p83, %p84
      %p87 = scmp.ne.s32.totalorder %s72, %s86
      %p88 = scmp.eq.s32.totalorder %s20, 0
      %p89 = por %p87, %p88
      %s91 = sadd.s32 %s90, 1
      %p94 = scmp.eq.s32.totalorder %s14, 1
      %p95 = scmp.ne.s32.totalorder %s90, %s92
      %p96 = scmp.eq.s32.totalorder %s14, 0
      %p97 = por %p95, %p96
      %p98 = scmp.ne.s32.totalorder %s90, %s92
      %p99 = scmp.eq.s32.totalorder %s19, 1
      %p100 = por %p98, %p99
      %p101 = scmp.ne.s32.totalorder %s92, %s93
      %p102 = scmp.eq.s32.totalorder %s19, 0
      %p103 = por %p101, %p102
      %p104 = scmp.ne.s32.totalorder %s92, %s93
      %p105 = scmp.eq.s32.totalorder %s20, 1
      %p106 = por %p104, %p105
      %p108 = scmp.ne.s32.totalorder %s93, %s107
      %p109 = scmp.eq.s32.totalorder %s20, 0
      %p110 = por %p108, %p109
      %s112 = sadd.s32 %s111, 1
      %p115 = scmp.eq.s32.totalorder %s14, 1
      %p116 = scmp.ne.s32.totalorder %s111, %s113
      %p117 = scmp.eq.s32.totalorder %s14, 0
      %p118 = por %p116, %p117
      %p119 = scmp.ne.s32.totalorder %s111, %s113
      %p120 = scmp.eq.s32.totalorder %s19, 1
      %p121 = por %p119, %p120
      %p122 = scmp.ne.s32.totalorder %s113, %s114
      %p123 = scmp.eq.s32.totalorder %s19, 0
      %p124 = por %p122, %p123
      %p125 = scmp.ne.s32.totalorder %s113, %s114
      %p126 = scmp.eq.s32.totalorder %s20, 1
      %p127 = por %p125, %p126
      %p129 = scmp.ne.s32.totalorder %s114, %s128
      %p130 = scmp.eq.s32.totalorder %s20, 0
      %p131 = por %p129, %p130
      %s132 = ssub.s32 %s14, %s21
      %p133 = scmp.eq.s32.totalorder %s132, 0
      %s135 = sadd.s32 %s134, 1
      %s136 = scalar_select %p133, %s134, %s135
      %p139 = pneg %p133
      %p140 = scmp.eq.s32.totalorder %s14, 1
      %p141 = por %p139, %p140
      %p142 = scmp.ne.s32.totalorder %s134, %s137
      %p143 = scmp.eq.s32.totalorder %s14, 0
      %p144 = por %p142, %p143
      %p145 = scmp.ne.s32.totalorder %s134, %s137
      %p146 = scmp.eq.s32.totalorder %s19, 1
      %p147 = por %p145, %p146
      %p148 = scmp.ne.s32.totalorder %s137, %s138
      %p149 = scmp.eq.s32.totalorder %s19, 0
      %p150 = por %p148, %p149
      %p151 = scmp.ne.s32.totalorder %s137, %s138
      %p152 = scmp.eq.s32.totalorder %s20, 1
      %p153 = por %p151, %p152
      %p155 = scmp.ne.s32.totalorder %s138, %s154
      %p156 = scmp.eq.s32.totalorder %s20, 0
      %p157 = por %p155, %p156
      %p158 = scmp.le.s32.totalorder 1, %s14
      %p159 = scmp.lt.s32.totalorder %s14, 3
      %p160 = pnand %p158, %p159
      %p161 = pneg %p160
      // Predicated region
      $region9: #{shared_mlp.1} parent=5 // pred_check
        _
      $region10: #{shared_mlp.1} parent=5 // pred_check_branch
        %163 = sbr.rel (%p160) target = $region12
      $region11: #{shared_mlp.1} parent=5 // pred_region
        %s164 = ssub.s32 %s14, 1
        // Predicated region
        $region13: #{shared_mlp.1} parent=11 // pred_check
          %p165 = pneg %p61
        $region14: #{shared_mlp.1} parent=11 // pred_check_branch
          %167 = sbr.rel (%p165) target = $region16
        $region15: #{shared_mlp.1} parent=11 // pred_region
          _
        $region16: #{shared_mlp.1} parent=11 // pred_fallthru
          _
        // Predicated region
        $region17: #{shared_mlp.1} parent=11 // pred_check
          %p168 = pneg %p82
        $region18: #{shared_mlp.1} parent=11 // pred_check_branch
          %170 = sbr.rel (%p168) target = $region20
        $region19: #{shared_mlp.1} parent=11 // pred_region
          _
        $region20: #{shared_mlp.1} parent=11 // pred_fallthru
          _
        // Predicated region
        $region21: #{shared_mlp.1} parent=11 // pred_check
          %p171 = pneg %p103
        $region22: #{shared_mlp.1} parent=11 // pred_check_branch
          %173 = sbr.rel (%p171) target = $region24
        $region23: #{shared_mlp.1} parent=11 // pred_region
          _
        $region24: #{shared_mlp.1} parent=11 // pred_fallthru
          _
        // Predicated region
        $region25: #{shared_mlp.1} parent=11 // pred_check
          %p174 = pneg %p124
        $region26: #{shared_mlp.1} parent=11 // pred_check_branch
          %176 = sbr.rel (%p174) target = $region28
        $region27: #{shared_mlp.1} parent=11 // pred_region
          _
        $region28: #{shared_mlp.1} parent=11 // pred_fallthru
          _
      $region12: #{shared_mlp.1} parent=5 // pred_fallthru
        _
      %p177 = scmp.lt.s32.totalorder %s14, 2
      // Predicated region
      $region29: #{shared_mlp.1} parent=5 // pred_check
        %p178 = pneg %p177
      $region30: #{shared_mlp.1} parent=5 // pred_check_branch
        %180 = sbr.rel (%p178) target = $region32
      $region31: #{shared_mlp.1} parent=5 // pred_region
        // Predicated region
        $region33: #{shared_mlp.1} parent=31 // pred_check
          %p181 = pneg %p34
        $region34: #{shared_mlp.1} parent=31 // pred_check_branch
          %183 = sbr.rel (%p181) target = $region36
        $region35: #{shared_mlp.1} parent=31 // pred_region
          %p184 = scmp.lt.s32.totalorder %s14, 1
          %s185 = scalar_select %p184, %s14, 1
          %s186 = smul.addr %s185, 8
          %s187 = scalar_lea.vmem %s0, %s186
        $region36: #{shared_mlp.1} parent=31 // pred_fallthru
          _
      $region32: #{shared_mlp.1} parent=5 // pred_fallthru
        _
      %p188 = scmp.le.s32.totalorder 1, %s14
      %p189 = scmp.lt.s32.totalorder %s14, 3
      %p190 = pnand %p188, %p189
      %p191 = pneg %p190
      // Predicated region
      $region37: #{shared_mlp.1} parent=5 // pred_check
        _
      $region38: #{shared_mlp.1} parent=5 // pred_check_branch
        %193 = sbr.rel (%p190) target = $region40
      $region39: #{shared_mlp.1} parent=5 // pred_region
        %s194 = ssub.s32 %s14, 1
        %p195 = scmp.lt.s32.totalorder %s19, 1
        %s196 = scalar_select %p195, %s19, 1
        %s197 = smul.addr %s196, 8
        %s198 = scalar_lea.vmem %s0, %s197
        %p199 = pneg %p40
        %p200 = pneg %p37
        %p201 = pneg %p61
        %p202 = pneg %p58
        %p203 = pneg %p82
        %p204 = pneg %p79
        %p205 = pneg %p103
        %p206 = pneg %p100
        %p207 = pneg %p124
        %p208 = pneg %p121
        %p209 = pneg %p150
        %p210 = pneg %p147
        %s211 = sand.u32 %s137, 1
        %s212 = scalar_lea.sflag [#allocation3], %s211
        %s213 = sand.u32 %s137, 1
        %s214 = smul.addr %s213, 8
        %s215 = scalar_lea.vmem [#allocation2], %s214
        %p216 = scmp.lt.s32.totalorder %s19, 1
        %s217 = scalar_select %p216, %s19, 1
        %s218 = smul.addr %s217, 8
        %s219 = scalar_lea.vmem %s0, %s218
        %v221 = vld [vmem:[%s219] sm:$0xff]
        %v222 = vpack.c.bf16 %v221, %v221
        %v223 = vld [vmem:[%s1] sm:$0xf]
        %v224 = vld [vmem:[%s1 + $0x4] sm:$0xf]
        %v225 = vld [vmem:[%s1 + $0x8] sm:$0xf]
        %v226 = vld [vmem:[%s1 + $0xc] sm:$0xf]
        %v227 = vld [vmem:[%s1 + $0x10] sm:$0xf]
        %v228 = vld [vmem:[%s1 + $0x14] sm:$0xf]
        %v229 = vld [vmem:[%s1 + $0x18] sm:$0xf]
        %v230 = vld [vmem:[%s1 + $0x1c] sm:$0xf]
        %v231 = vld [vmem:[%s2] sm:$0x1]
        %v233 = vlaneseq
        %v234 = vshrl.u32 %v233, 7
        %v235 = vsub.s32 0, %v234
        %v236 = vrot.slane %v231, %v235
        %v246 = vunpack.c.l.b16 %v223
        %v247 = vunpack.c.l.b16 %v224
        %v248 = vunpack.c.l.b16 %v225
        %v249 = vunpack.c.l.b16 %v226
        %v250 = vunpack.c.l.b16 %v227
        %v251 = vunpack.c.l.b16 %v228
        %v252 = vunpack.c.l.b16 %v229
        %v253 = vunpack.c.l.b16 %v230
        %v254 = vpack.c.b16 %v247, %v246
        %v255 = vpack.c.b16 %v249, %v248
        %v256 = vpack.c.b16 %v251, %v250
        %v257 = vpack.c.b16 %v253, %v252
        %vm262 = vcmask 523264
        %v264 = vsel %vm262, %v222, 0
        %266 = vmatprep.subr.bf16.mxu0 0
        %267 = vmatpush1.bf16.msra.mxu0 0
        %268 = vmatprep.subr.bf16.mxu0 0
        %269 = vmatpush1.bf16.msra.mxu0 0
        %270 = vmatprep.subr.bf16.mxu0 0
        %271 = vmatpush1.bf16.msra.mxu0 0
        %272 = vmatprep.subr.bf16.mxu0 0
        %273 = vmatpush1.bf16.msra.mxu0 0
        %274 = vmatprep.subr.bf16.mxu0 0
        %275 = vmatpush1.bf16.msra.mxu0 %v257
        %276 = vmatprep.subr.bf16.mxu0 0
        %277 = vmatpush1.bf16.msra.mxu0 %v256
        %278 = vmatprep.subr.bf16.mxu0 0
        %279 = vmatpush1.bf16.msra.mxu0 %v255
        %280 = vmatprep.subr.bf16.mxu0 0
        %281 = vmatpush1.bf16.msra.mxu0 %v254
        %282 = vmatprep.subr.bf16.mxu0 0
        %283 = vmatpush2.bf16.msra.mxu0 0
        %284 = vmatprep.subr.bf16.mxu0 0
        %285 = vmatpush2.bf16.msra.mxu0 0
        %286 = vmatprep.subr.bf16.mxu0 0
        %287 = vmatpush2.bf16.msra.mxu0 0
        %288 = vmatprep.subr.bf16.mxu0 0
        %289 = vmatpush2.bf16.msra.mxu0 0
        %290 = vmatprep.subr.bf16.mxu0 0
        %291 = vmatpush2.bf16.msra.mxu0 0
        %292 = vmatprep.subr.bf16.mxu0 0
        %293 = vmatpush2.bf16.msra.mxu0 0
        %294 = vmatprep.subr.bf16.mxu0 0
        %295 = vmatpush2.bf16.msra.mxu0 0
        %296 = vmatprep.subr.bf16.mxu0 0
        %297 = vmatpush2.bf16.msra.mxu0 0
        %298 = vmatprep.mubr.bf16.mxu0 0
        %299 = vmatmul.mubr.bf16.gmra.mxu0 %v264
        %v300 = vpop.f32.mrf.mxu0
        %v301 = vadd.f32 %v236, %v300
        %v302 = vpop.f32.mrf.mxu0
        %v303 = vpop.f32.mrf.mxu0
        %v304 = vpop.f32.mrf.mxu0
        %305 = vdwg.mxu0
        %v306 = vmax.f32 %v301, 0.0
        %v307 = vpack.c.bf16 %v306, %v306
        %v308 = vld [vmem:[%s3] sm:$0xf]
        %v309 = vld [vmem:[%s3 + $0x4] sm:$0xf]
        %v310 = vld [vmem:[%s3 + $0x8] sm:$0xf]
        %v311 = vld [vmem:[%s3 + $0xc] sm:$0xf]
        %v312 = vld [vmem:[%s3 + $0x10] sm:$0xf]
        %v313 = vld [vmem:[%s3 + $0x14] sm:$0xf]
        %v314 = vld [vmem:[%s3 + $0x18] sm:$0xf]
        %v315 = vld [vmem:[%s3 + $0x1c] sm:$0xf]
        %v316 = vld [vmem:[%s3 + $0x20] sm:$0xf]
        %v317 = vld [vmem:[%s3 + $0x24] sm:$0xf]
        %v318 = vld [vmem:[%s3 + $0x28] sm:$0xf]
        %v319 = vld [vmem:[%s3 + $0x2c] sm:$0xf]
        %v320 = vld [vmem:[%s3 + $0x30] sm:$0xf]
        %v321 = vld [vmem:[%s3 + $0x34] sm:$0xf]
        %v322 = vld [vmem:[%s3 + $0x38] sm:$0xf]
        %v323 = vld [vmem:[%s3 + $0x3c] sm:$0xf]
        %v324 = vld [vmem:[%s4] sm:$0x1]
        %v326 = vlaneseq
        %v327 = vshrl.u32 %v326, 7
        %v328 = vsub.s32 0, %v327
        %v329 = vrot.slane %v324, %v328
        %v347 = vunpack.c.l.b16 %v308
        %v348 = vunpack.c.l.b16 %v309
        %v349 = vunpack.c.l.b16 %v310
        %v350 = vunpack.c.l.b16 %v311
        %v351 = vunpack.c.l.b16 %v312
        %v352 = vunpack.c.l.b16 %v313
        %v353 = vunpack.c.l.b16 %v314
        %v354 = vunpack.c.l.b16 %v315
        %v355 = vunpack.c.l.b16 %v316
        %v356 = vunpack.c.l.b16 %v317
        %v357 = vunpack.c.l.b16 %v318
        %v358 = vunpack.c.l.b16 %v319
        %v359 = vunpack.c.l.b16 %v320
        %v360 = vunpack.c.l.b16 %v321
        %v361 = vunpack.c.l.b16 %v322
        %v362 = vunpack.c.l.b16 %v323
        %v363 = vpack.c.b16 %v348, %v347
        %v364 = vpack.c.b16 %v350, %v349
        %v365 = vpack.c.b16 %v352, %v351
        %v366 = vpack.c.b16 %v354, %v353
        %v367 = vpack.c.b16 %v356, %v355
        %v368 = vpack.c.b16 %v358, %v357
        %v369 = vpack.c.b16 %v360, %v359
        %v370 = vpack.c.b16 %v362, %v361
        %379 = vmatprep.subr.bf16.mxu0 0
        %380 = vmatpush1.bf16.msra.mxu0 %v370
        %381 = vmatprep.subr.bf16.mxu0 0
        %382 = vmatpush1.bf16.msra.mxu0 %v369
        %383 = vmatprep.subr.bf16.mxu0 0
        %384 = vmatpush1.bf16.msra.mxu0 %v368
        %385 = vmatprep.subr.bf16.mxu0 0
        %386 = vmatpush1.bf16.msra.mxu0 %v367
        %387 = vmatprep.subr.bf16.mxu0 0
        %388 = vmatpush1.bf16.msra.mxu0 %v366
        %389 = vmatprep.subr.bf16.mxu0 0
        %390 = vmatpush1.bf16.msra.mxu0 %v365
        %391 = vmatprep.subr.bf16.mxu0 0
        %392 = vmatpush1.bf16.msra.mxu0 %v364
        %393 = vmatprep.subr.bf16.mxu0 0
        %394 = vmatpush1.bf16.msra.mxu0 %v363
        %395 = vmatprep.subr.bf16.mxu0 0
        %396 = vmatpush2.bf16.msra.mxu0 0
        %397 = vmatprep.subr.bf16.mxu0 0
        %398 = vmatpush2.bf16.msra.mxu0 0
        %399 = vmatprep.subr.bf16.mxu0 0
        %400 = vmatpush2.bf16.msra.mxu0 0
        %401 = vmatprep.subr.bf16.mxu0 0
        %402 = vmatpush2.bf16.msra.mxu0 0
        %403 = vmatprep.subr.bf16.mxu0 0
        %404 = vmatpush2.bf16.msra.mxu0 0
        %405 = vmatprep.subr.bf16.mxu0 0
        %406 = vmatpush2.bf16.msra.mxu0 0
        %407 = vmatprep.subr.bf16.mxu0 0
        %408 = vmatpush2.bf16.msra.mxu0 0
        %409 = vmatprep.subr.bf16.mxu0 0
        %410 = vmatpush2.bf16.msra.mxu0 0
        %411 = vmatprep.mubr.bf16.mxu0 0
        %412 = vmatmul.mubr.bf16.gmra.mxu0 %v307
        %v413 = vpop.f32.mrf.mxu0
        %v414 = vadd.f32 %v329, %v413
        %v415 = vpop.f32.mrf.mxu0
        %v416 = vpop.f32.mrf.mxu0
        %v417 = vpop.f32.mrf.mxu0
        %418 = vdwg.mxu0
        %vm419 = vcmask 261120
        %420 = vst.msk [vmem:[%s215] sm:$0xff] %vm419, %v414
        %s421 = sand.u32 %s137, 1
        %s422 = scalar_lea.sflag [#allocation3], %s421
        %s423 = sand.u32 %s137, 1
        %s424 = smul.addr %s423, 8
        %s425 = scalar_lea.vmem [#allocation2], %s424
        // Predicated region
        $region41: #{shared_mlp.1} parent=39 // pred_check
          %p426 = pneg %p147
        $region42: #{shared_mlp.1} parent=39 // pred_check_branch
          %428 = sbr.rel (%p426) target = $region44
        $region43: #{shared_mlp.1} parent=39 // pred_region
          %s430 = ssub.s32 128, 128
          %431 = vsyncadd %s422, %s430
          %s432 = smul.addr %s19, 128
          %s433 = scalar_lea.hbm %s5, %s432
          %s435 = sshll.u32 %s425, 4
          %s436 = int_to_ptr.vmem [resolvable:$true] %s435
          %438 = dma.vmem_to_hbm [thread:$0]  %s436, 128, %s433, %s422
        $region44: #{shared_mlp.1} parent=39 // pred_fallthru
          _
      $region40: #{shared_mlp.1} parent=5 // pred_fallthru
        _
      %p439 = scmp.le.s32.totalorder 2, %s14
      // Predicated region
      $region45: #{shared_mlp.1} parent=5 // pred_check
        %p440 = pneg %p439
      $region46: #{shared_mlp.1} parent=5 // pred_check_branch
        %442 = sbr.rel (%p440) target = $region48
      $region47: #{shared_mlp.1} parent=5 // pred_region
        %s443 = ssub.s32 %s14, 2
        // Predicated region
        $region49: #{shared_mlp.1} parent=47 // pred_check
          %p444 = pneg %p153
        $region50: #{shared_mlp.1} parent=47 // pred_check_branch
          %446 = sbr.rel (%p444) target = $region52
        $region51: #{shared_mlp.1} parent=47 // pred_region
          %s447 = sand.u32 %s138, 1
          %s448 = scalar_lea.sflag [#allocation3], %s447
          %s449 = sand.u32 %s138, 1
          %s450 = smul.addr %s449, 8
          %s451 = scalar_lea.vmem [#allocation2], %s450
          %452 = dma.done %s448, 128
        $region52: #{shared_mlp.1} parent=47 // pred_fallthru
          _
      $region48: #{shared_mlp.1} parent=5 // pred_fallthru
        _
    $region6: #{shared_mlp.1} parent=1 // loop_footer
      %s18 = sadd.s32 1, %s14
    $region7: #{shared_mlp.1} parent=1 // loop_footer_branch
      %13 = sbr.rel target = $region3
    $region8: #{shared_mlp.1} parent=1 // loop_exit
      _
    %453 = vsyncpa [#allocation3], 1
    %s454 = scalar_lea.sflag [#allocation3], 1
    %455 = vsyncpa %s454, 1

</llo_original>
